<compile_context>
chip_gen: v6e
topology: v6e:2x2x1
jax: 0.10.0
libtpu: 0.0.40
codegen_flags: <defaults>
</compile_context>

<pallas_src>
import math

import jax
import jax.numpy as jnp
from jax.experimental import pallas as pl
from jax.experimental.pallas import tpu as pltpu


# ----------------------------------------------------------------------------
# Adaptive average pooling expressed as a (Q, S) matrix (matches
# torch.nn.AdaptiveAvgPool2d index arithmetic exactly, kept in f32).
# ----------------------------------------------------------------------------
def adaptive_avg_pool_matrix(in_hw: int, out_hw: int) -> jnp.ndarray:
    """P with shape (out_hw*out_hw, in_hw*in_hw) such that pooled_flat = P @ x_flat
    reproduces AdaptiveAvgPool2d((out_hw, out_hw)) on a row-major (in_hw, in_hw) grid."""
    def axis_weights(n_in, n_out):
        w = [[0.0] * n_in for _ in range(n_out)]
        for i in range(n_out):
            start = (i * n_in) // n_out
            end = -((-(i + 1) * n_in) // n_out)  # ceil((i+1)*n_in/n_out)
            cnt = end - start
            for r in range(start, end):
                w[i][r] = 1.0 / cnt
        return jnp.array(w, dtype=jnp.float32)  # (n_out, n_in)

    R = axis_weights(in_hw, out_hw)
    C = axis_weights(in_hw, out_hw)
    return jnp.einsum("ir,jc->ijrc", R, C).reshape(out_hw * out_hw, in_hw * in_hw)


# ----------------------------------------------------------------------------
# Kernel: pool-matmul -> Linear1 -> exact GELU -> Linear2 (split-K accumulate)
# ----------------------------------------------------------------------------
def _make_kernel(BB, Q, D, L, tk, reshape_store):
    inv_sqrt2 = 1.0 / math.sqrt(2.0)

    def kernel(p_ref, x_ref, w1_ref, b1_ref, w2_ref, b2_ref, o_ref,
               pooled_ref, acc_ref):
        k = pl.program_id(1)

        @pl.when(k == 0)
        def _init():
            # Adaptive-avg-pool as an f32 matmul (exact pooling weights), folding
            # the batch block into the M dimension of the MLP matmuls. Runs once
            # per batch block (k == 0 only), so the tiny per-bb loop is cheap.
            for bb in range(BB):
                pooled = jnp.dot(p_ref[...], x_ref[bb].astype(jnp.float32),
                                 preferred_element_type=jnp.float32)   # [Q, D]
                pooled_ref[bb * Q:(bb + 1) * Q, :] = pooled.astype(jnp.bfloat16)
            acc_ref[...] = jnp.zeros_like(acc_ref)

        # Linear1 tile (M x tk), f32 accumulation; bias + exact erf-GELU in f32
        # (matches PyTorch nn.GELU default; v5e-safe since no bf16 VPU there).
        h = jnp.dot(pooled_ref[...], w1_ref[...],
                    preferred_element_type=jnp.float32) + b1_ref[...]
        h = 0.5 * h * (1.0 + jax.lax.erf(h * inv_sqrt2))
        # Linear2 split-K partial product over this k tile, f32 accumulation.
        acc_ref[...] += jnp.dot(h.astype(jnp.bfloat16), w2_ref[...],
                                preferred_element_type=jnp.float32)

        @pl.when(k == pl.num_programs(1) - 1)
        def _finalize():
            out = acc_ref[...] + b2_ref[...]                 # (BB*Q, L) f32
            if reshape_store:
                # Single lane-dense store; (BB*Q, L) -> (BB, Q, L) only regroups
                # sublanes (Q % 8 == 0), lane dim L untouched.
                o_ref[...] = out.reshape(BB, Q, L).astype(o_ref.dtype)
            else:
                for bb in range(BB):
                    o_ref[bb] = out[bb * Q:(bb + 1) * Q, :].astype(o_ref.dtype)

    return kernel


# ----------------------------------------------------------------------------
# VMEM-budget-aware tiling plan.
# ----------------------------------------------------------------------------
def _vmem_capacity_bytes():
    try:
        info = pltpu.get_tpu_info()
        cap = getattr(info, "vmem_capacity_bytes", None)
        if cap:
            return int(cap)
    except Exception:
        pass
    return 64 << 20  # conservative fallback: smallest per-core VMEM (v7x)


def _estimate_vmem_bytes(BB, tk, Q, S, D, L, x_itemsize, out_itemsize):
    M = BB * Q
    dbuf = 2 * (Q * S * 4                      # pooling matrix (f32)
                + BB * S * D * x_itemsize      # visual features
                + D * tk * 2                   # W1 tile (bf16)
                + tk * 4                       # b1 tile (f32)
                + tk * L * 2                   # W2 tile (bf16)
                + L * 4                        # b2 (f32)
                + BB * Q * L * out_itemsize)   # output tile
    scratch = M * D * 2 + M * L * 4            # pooled (bf16) + acc (f32)
    return dbuf + scratch


def _divisors_desc(n):
    return [d for d in range(n, 0, -1) if n % d == 0]


def _plan_tiling(B, Q, S, D, L, x_itemsize, out_itemsize, budget,
                 batch_block=None, k_tile=None, target_m=768):
    # k-tile candidates, largest first: bigger tk cuts accumulator RMW traffic
    # and per-grid-step overhead.
    if k_tile is not None:
        assert L % k_tile == 0 and (k_tile % 128 == 0 or k_tile == L)
        tk_cands = [k_tile]
    elif L % 128 != 0:
        tk_cands = [L]
    else:
        tk_cands = [t for t in (2048, 1024, 512, 256, 128) if L % t == 0] or [L]

    # Batch-block candidates: fold batch into M for arithmetic intensity, but
    # keep num_b = B/BB >= 2 whenever B >= 2 so the "parallel" batch axis can
    # split across v7x's two TensorCores.
    if batch_block is not None:
        assert B % batch_block == 0
        bb_cands = [batch_block]
    else:
        bb_cap = B if B < 2 else B // 2
        desired = max(1, -(-target_m // max(Q, 1)))  # ceil(target_m / Q)
        bb_cands = [d for d in _divisors_desc(B)
                    if d <= min(bb_cap, desired)] or [1]

    for BB in bb_cands:                 # prioritize M (intensity) over tk
        for tk in tk_cands:
            if _estimate_vmem_bytes(BB, tk, Q, S, D, L,
                                    x_itemsize, out_itemsize) <= budget:
                return BB, tk
    return bb_cands[-1], tk_cands[-1]   # smallest-footprint fallback


# ----------------------------------------------------------------------------
# Wrapper.
# ----------------------------------------------------------------------------
def avg_pool_projector(x, pool_mat, w1, b1, w2, b2, *,
                       out_dtype=jnp.bfloat16, batch_block=None, k_tile=None,
                       target_m=768):
    """x: [B, S, D] -> [B, Q, L] (Q = pool_mat rows, L = w1 cols)."""
    B, S, D = x.shape
    Q = pool_mat.shape[0]
    L = w1.shape[1]

    cap = _vmem_capacity_bytes()
    plan_budget = int(cap * 0.72)          # leave compiler headroom
    x_itemsize = jnp.dtype(x.dtype).itemsize
    out_itemsize = jnp.dtype(out_dtype).itemsize
    BB, tk = _plan_tiling(B, Q, S, D, L, x_itemsize, out_itemsize, plan_budget,
                          batch_block=batch_block, k_tile=k_tile,
                          target_m=target_m)
    num_b, num_k = B // BB, L // tk

    # bf16 MXU weights (no-op if caller keeps persistent bf16 copies).
    w1b = w1 if w1.dtype == jnp.bfloat16 else w1.astype(jnp.bfloat16)
    w2b = w2 if w2.dtype == jnp.bfloat16 else w2.astype(jnp.bfloat16)
    b1_2d = b1.reshape(1, L).astype(jnp.float32)
    b2_2d = b2.reshape(1, L).astype(jnp.float32)
    p_f32 = pool_mat.astype(jnp.float32)   # exact pooling weights

    est = _estimate_vmem_bytes(BB, tk, Q, S, D, L, x_itemsize, out_itemsize)
    vmem_limit = int(min(max(int(1.25 * est) + (4 << 20), 32 << 20),
                         cap * 7 // 8))    # generation-aware cap w/ headroom

    reshape_store = (Q % 8 == 0) or (BB == 1)
    kernel = _make_kernel(BB, Q, D, L, tk, reshape_store)

    return pl.pallas_call(
        kernel,
        out_shape=jax.ShapeDtypeStruct((B, Q, L), out_dtype),
        grid_spec=pltpu.PrefetchScalarGridSpec(
            num_scalar_prefetch=0,
            grid=(num_b, num_k),
            in_specs=[
                pl.BlockSpec((Q, S), lambda b, k: (0, 0)),          # P (f32)
                pl.BlockSpec((BB, S, D), lambda b, k: (b, 0, 0)),   # visual feats
                pl.BlockSpec((D, tk), lambda b, k: (0, k)),         # W1 (N-tiled)
                pl.BlockSpec((1, tk), lambda b, k: (0, k)),         # b1
                pl.BlockSpec((tk, L), lambda b, k: (k, 0)),         # W2 (K-tiled)
                pl.BlockSpec((1, L), lambda b, k: (0, 0)),          # b2
            ],
            out_specs=pl.BlockSpec((BB, Q, L), lambda b, k: (b, 0, 0)),
            scratch_shapes=[
                pltpu.VMEM((BB * Q, D), jnp.bfloat16),   # pooled, M x D
                pltpu.VMEM((BB * Q, L), jnp.float32),    # Linear2 split-K acc
            ],
        ),
        compiler_params=pltpu.CompilerParams(
            dimension_semantics=("parallel", "arbitrary"),
            vmem_limit_bytes=vmem_limit,
        ),
    )(p_f32, x, w1b, b1_2d, w2b, b2_2d)


# ----------------------------------------------------------------------------
# Pure-JAX reference with matching precision choices.
# ----------------------------------------------------------------------------
def reference(x, pool_mat, w1, b1, w2, b2, out_dtype=jnp.bfloat16):
    pooled = jnp.einsum("qs,bsd->bqd", pool_mat.astype(jnp.float32),
                        x.astype(jnp.float32),
                        preferred_element_type=jnp.float32)
    h = jnp.dot(pooled.astype(jnp.bfloat16), w1.astype(jnp.bfloat16),
                preferred_element_type=jnp.float32) + b1.astype(jnp.float32)
    h = jax.nn.gelu(h, approximate=False)
    out = jnp.dot(h.astype(jnp.bfloat16), w2.astype(jnp.bfloat16),
                  preferred_element_type=jnp.float32) + b2.astype(jnp.float32)
    return out.astype(out_dtype)


if __name__ == "__main__":
    # Small shapes consistent with the module's forward():
    #   layer_num=2, query_num=16 (-> 4x4 pooled grid), input grid 8x8 -> S=64,
    #   mm_hidden_size=32, llm_hidden_size=256.
    B = 4
    in_hw = 8
    S = in_hw * in_hw
    D = 32
    L = 256
    query_num = 16
    out_hw = int(query_num ** 0.5)
    Q = out_hw * out_hw

    key = jax.random.PRNGKey(0)
    kx, kw1, kb1, kw2, kb2 = jax.random.split(key, 5)

    x = jax.random.normal(kx, (B, S, D), dtype=jnp.float32)

    # Deterministic synthetic parameters (not a checkpoint); weights kept as
    # persistent bf16 copies so the per-call cast is a no-op.
    w1 = (jax.random.normal(kw1, (D, L), dtype=jnp.float32)
          * (1.0 / math.sqrt(D))).astype(jnp.bfloat16)
    b1 = jax.random.normal(kb1, (L,), dtype=jnp.float32) * 0.01
    w2 = (jax.random.normal(kw2, (L, L), dtype=jnp.float32)
          * (1.0 / math.sqrt(L))).astype(jnp.bfloat16)
    b2 = jax.random.normal(kb2, (L,), dtype=jnp.float32) * 0.01

    pool_mat = adaptive_avg_pool_matrix(in_hw, out_hw)  # [Q, S]

    ref = reference(x, pool_mat, w1, b1, w2, b2)

    # 1) Explicit tiling (batch_block=2, k_tile=128 -> grid (2, 2)): exercises
    #    both the parallel batch-block axis and the split-K accumulation path.
    out = avg_pool_projector(x, pool_mat, w1, b1, w2, b2,
                             batch_block=2, k_tile=128)
    out = jax.block_until_ready(out)
    assert out.shape == (B, Q, L) and out.dtype == jnp.bfloat16
    assert jnp.allclose(out.astype(jnp.float32), ref.astype(jnp.float32),
                        atol=2e-2, rtol=2e-2), "mismatch vs reference (explicit)"

    # 2) Auto-planned tiling (VMEM-budget aware; keeps num_b >= 2).
    out_auto = avg_pool_projector(x, pool_mat, w1, b1, w2, b2)
    out_auto = jax.block_until_ready(out_auto)
    assert out_auto.shape == (B, Q, L)
    assert jnp.allclose(out_auto.astype(jnp.float32), ref.astype(jnp.float32),
                        atol=2e-2, rtol=2e-2), "mismatch vs reference (auto)"

    print("KERNEL_OK")
</pallas_src>

<mosaic_0001>
module attributes {stable_mosaic.version = 11 : i64} {
  func.func @kernel(%arg0: i32, %arg1: i32, %arg2: memref<16x64xf32, #tpu.memory_space<vmem>>, %arg3: memref<2x64x32xf32, #tpu.memory_space<vmem>>, %arg4: memref<32x128xbf16, #tpu.memory_space<vmem>>, %arg5: memref<1x128xf32, #tpu.memory_space<vmem>>, %arg6: memref<128x256xbf16, #tpu.memory_space<vmem>>, %arg7: memref<1x256xf32, #tpu.memory_space<vmem>>, %arg8: memref<2x16x256xbf16, #tpu.memory_space<vmem>>, %arg9: memref<32x32xbf16, #tpu.memory_space<vmem>>, %arg10: memref<32x256xf32, #tpu.memory_space<vmem>>) attributes {dimension_semantics = [#tpu.dimension_semantics<parallel>, #tpu.dimension_semantics<arbitrary>], iteration_bounds = array<i64: 2, 2>, scalar_prefetch = 0 : i64, scratch_operands = 2 : i64, tpu.core_type = #tpu.core_type<tc>, window_params = [{pipeline_mode = #tpu.pipeline_mode<synchronous>, transform_indices = @transform_0, window_bounds = array<i64: 16, 64>}, {transform_indices = @transform_1, window_bounds = array<i64: 2, 64, 32>}, {transform_indices = @transform_2, window_bounds = array<i64: 32, 128>}, {transform_indices = @transform_3, window_bounds = array<i64: 1, 128>}, {transform_indices = @transform_4, window_bounds = array<i64: 128, 256>}, {pipeline_mode = #tpu.pipeline_mode<synchronous>, transform_indices = @transform_5, window_bounds = array<i64: 1, 256>}, {transform_indices = @transform_6, window_bounds = array<i64: 2, 16, 256>}]} {
    %c0_i32 = arith.constant 0 : i32
    %0 = arith.cmpi eq, %arg1, %c0_i32 : i32
    %1 = arith.extui %0 : i1 to i32
    %c0_i32_0 = arith.constant 0 : i32
    %2 = arith.cmpi ne, %1, %c0_i32_0 : i32
    scf.if %2 {
      %c0_17 = arith.constant 0 : index
      %c0_18 = arith.constant 0 : index
      %26 = vector.load %arg2[%c0_17, %c0_18] : memref<16x64xf32, #tpu.memory_space<vmem>>, vector<16x64xf32>
      %c0_19 = arith.constant 0 : index
      %c0_20 = arith.constant 0 : index
      %c0_21 = arith.constant 0 : index
      %27 = vector.load %arg3[%c0_19, %c0_20, %c0_21] : memref<2x64x32xf32, #tpu.memory_space<vmem>>, vector<1x64x32xf32>
      %28 = vector.shape_cast %27 : vector<1x64x32xf32> to vector<64x32xf32>
      %cst_22 = arith.constant dense<0.000000e+00> : vector<16x32xf32>
      %29 = tpu.matmul %26, %28, %cst_22 {dimension_numbers = #tpu.dot_dimension_numbers<[1], [0], [0], [1], [0, 0, 1, 1], [], []>} : vector<16x64xf32>, vector<64x32xf32>, vector<16x32xf32> -> vector<16x32xf32>
      %30 = arith.truncf %29 : vector<16x32xf32> to vector<16x32xbf16>
      %c0_23 = arith.constant 0 : index
      %c0_24 = arith.constant 0 : index
      %31 = vector.load %arg9[%c0_23, %c0_24] : memref<32x32xbf16, #tpu.memory_space<vmem>>, vector<16x32xbf16>
      tpu.vector_store %arg9[%c0_23, %c0_24], %30 {strides = array<i32>} : memref<32x32xbf16, #tpu.memory_space<vmem>>, vector<16x32xbf16>,
      %c0_25 = arith.constant 0 : index
      %c0_26 = arith.constant 0 : index
      %32 = vector.load %arg2[%c0_25, %c0_26] : memref<16x64xf32, #tpu.memory_space<vmem>>, vector<16x64xf32>
      %c1 = arith.constant 1 : index
      %c0_27 = arith.constant 0 : index
      %c0_28 = arith.constant 0 : index
      %33 = vector.load %arg3[%c1, %c0_27, %c0_28] : memref<2x64x32xf32, #tpu.memory_space<vmem>>, vector<1x64x32xf32>
      %34 = vector.shape_cast %33 : vector<1x64x32xf32> to vector<64x32xf32>
      %cst_29 = arith.constant dense<0.000000e+00> : vector<16x32xf32>
      %35 = tpu.matmul %32, %34, %cst_29 {dimension_numbers = #tpu.dot_dimension_numbers<[1], [0], [0], [1], [0, 0, 1, 1], [], []>} : vector<16x64xf32>, vector<64x32xf32>, vector<16x32xf32> -> vector<16x32xf32>
      %36 = arith.truncf %35 : vector<16x32xf32> to vector<16x32xbf16>
      %c16 = arith.constant 16 : index
      %c0_30 = arith.constant 0 : index
      %37 = vector.load %arg9[%c16, %c0_30] : memref<32x32xbf16, #tpu.memory_space<vmem>>, vector<16x32xbf16>
      tpu.vector_store %arg9[%c16, %c0_30], %36 {strides = array<i32>} : memref<32x32xbf16, #tpu.memory_space<vmem>>, vector<16x32xbf16>,
      %cst_31 = arith.constant 0.000000e+00 : f32
      %38 = vector.broadcast %cst_31 : f32 to vector<32x256xf32>
      %c0_32 = arith.constant 0 : index
      %c0_33 = arith.constant 0 : index
      %39 = vector.load %arg10[%c0_32, %c0_33] : memref<32x256xf32, #tpu.memory_space<vmem>>, vector<32x256xf32>
      tpu.vector_store %arg10[%c0_32, %c0_33], %38 {strides = array<i32>} : memref<32x256xf32, #tpu.memory_space<vmem>>, vector<32x256xf32>,
    } else {
    }
    %c0 = arith.constant 0 : index
    %c0_1 = arith.constant 0 : index
    %3 = vector.load %arg9[%c0, %c0_1] : memref<32x32xbf16, #tpu.memory_space<vmem>>, vector<32x32xbf16>
    %c0_2 = arith.constant 0 : index
    %c0_3 = arith.constant 0 : index
    %4 = vector.load %arg4[%c0_2, %c0_3] : memref<32x128xbf16, #tpu.memory_space<vmem>>, vector<32x128xbf16>
    %cst = arith.constant dense<0.000000e+00> : vector<32x128xf32>
    %5 = tpu.matmul %3, %4, %cst {dimension_numbers = #tpu.dot_dimension_numbers<[1], [0], [0], [1], [0, 0, 1, 1], [], []>} : vector<32x32xbf16>, vector<32x128xbf16>, vector<32x128xf32> -> vector<32x128xf32>
    %c0_4 = arith.constant 0 : index
    %c0_5 = arith.constant 0 : index
    %6 = vector.load %arg5[%c0_4, %c0_5] : memref<1x128xf32, #tpu.memory_space<vmem>>, vector<1x128xf32>
    %7 = vector.broadcast %6 : vector<1x128xf32> to vector<32x128xf32>
    %8 = arith.addf %5, %7 : vector<32x128xf32>
    %cst_6 = arith.constant 5.000000e-01 : f32
    %9 = vector.broadcast %cst_6 : f32 to vector<32x128xf32>
    %10 = arith.mulf %9, %8 : vector<32x128xf32>
    %cst_7 = arith.constant 0.707106769 : f32
    %11 = vector.broadcast %cst_7 : f32 to vector<32x128xf32>
    %12 = arith.mulf %8, %11 : vector<32x128xf32>
    %13 = math.erf %12 : vector<32x128xf32>
    %cst_8 = arith.constant 1.000000e+00 : f32
    %14 = vector.broadcast %cst_8 : f32 to vector<32x128xf32>
    %15 = arith.addf %14, %13 : vector<32x128xf32>
    %16 = arith.mulf %10, %15 : vector<32x128xf32>
    %c0_9 = arith.constant 0 : index
    %c0_10 = arith.constant 0 : index
    %17 = vector.load %arg10[%c0_9, %c0_10] : memref<32x256xf32, #tpu.memory_space<vmem>>, vector<32x256xf32>
    %18 = arith.truncf %16 : vector<32x128xf32> to vector<32x128xbf16>
    %c0_11 = arith.constant 0 : index
    %c0_12 = arith.constant 0 : index
    %19 = vector.load %arg6[%c0_11, %c0_12] : memref<128x256xbf16, #tpu.memory_space<vmem>>, vector<128x256xbf16>
    %cst_13 = arith.constant dense<0.000000e+00> : vector<32x256xf32>
    %20 = tpu.matmul %18, %19, %cst_13 {dimension_numbers = #tpu.dot_dimension_numbers<[1], [0], [0], [1], [0, 0, 1, 1], [], []>} : vector<32x128xbf16>, vector<128x256xbf16>, vector<32x256xf32> -> vector<32x256xf32>
    %21 = arith.addf %17, %20 : vector<32x256xf32>
    %c0_14 = arith.constant 0 : index
    %c0_15 = arith.constant 0 : index
    %22 = vector.load %arg10[%c0_14, %c0_15] : memref<32x256xf32, #tpu.memory_space<vmem>>, vector<32x256xf32>
    tpu.vector_store %arg10[%c0_14, %c0_15], %21 {strides = array<i32>} : memref<32x256xf32, #tpu.memory_space<vmem>>, vector<32x256xf32>,
    %c1_i32 = arith.constant 1 : i32
    %23 = arith.cmpi eq, %arg1, %c1_i32 : i32
    %24 = arith.extui %23 : i1 to i32
    %c0_i32_16 = arith.constant 0 : i32
    %25 = arith.cmpi ne, %24, %c0_i32_16 : i32
    scf.if %25 {
      %c0_17 = arith.constant 0 : index
      %c0_18 = arith.constant 0 : index
      %26 = vector.load %arg10[%c0_17, %c0_18] : memref<32x256xf32, #tpu.memory_space<vmem>>, vector<32x256xf32>
      %c0_19 = arith.constant 0 : index
      %c0_20 = arith.constant 0 : index
      %27 = vector.load %arg7[%c0_19, %c0_20] : memref<1x256xf32, #tpu.memory_space<vmem>>, vector<1x256xf32>
      %28 = vector.broadcast %27 : vector<1x256xf32> to vector<32x256xf32>
      %29 = arith.addf %26, %28 : vector<32x256xf32>
      %30 = vector.shape_cast %29 : vector<32x256xf32> to vector<2x16x256xf32>
      %31 = arith.truncf %30 : vector<2x16x256xf32> to vector<2x16x256xbf16>
      %c0_21 = arith.constant 0 : index
      %c0_22 = arith.constant 0 : index
      %c0_23 = arith.constant 0 : index
      %32 = vector.load %arg8[%c0_21, %c0_22, %c0_23] : memref<2x16x256xbf16, #tpu.memory_space<vmem>>, vector<2x16x256xbf16>
      tpu.vector_store %arg8[%c0_21, %c0_22, %c0_23], %31 {strides = array<i32>} : memref<2x16x256xbf16, #tpu.memory_space<vmem>>, vector<2x16x256xbf16>,
    } else {
    }
    return
  }
  func.func @transform_0(%arg0: i32, %arg1: i32) -> (i32, i32) {
    %c0_i32 = arith.constant 0 : i32
    %c0_i32_0 = arith.constant 0 : i32
    %c0_i32_1 = arith.constant 0 : i32
    return %c0_i32, %c0_i32_0 : i32, i32
  }
  func.func @transform_1(%arg0: i32, %arg1: i32) -> (i32, i32, i32) {
    %c0_i32 = arith.constant 0 : i32
    %c0_i32_0 = arith.constant 0 : i32
    %c0_i32_1 = arith.constant 0 : i32
    return %arg0, %c0_i32, %c0_i32_0 : i32, i32, i32
  }
  func.func @transform_2(%arg0: i32, %arg1: i32) -> (i32, i32) {
    %c0_i32 = arith.constant 0 : i32
    %c0_i32_0 = arith.constant 0 : i32
    return %c0_i32, %arg1 : i32, i32
  }
  func.func @transform_3(%arg0: i32, %arg1: i32) -> (i32, i32) {
    %c0_i32 = arith.constant 0 : i32
    %c0_i32_0 = arith.constant 0 : i32
    return %c0_i32, %arg1 : i32, i32
  }
  func.func @transform_4(%arg0: i32, %arg1: i32) -> (i32, i32) {
    %c0_i32 = arith.constant 0 : i32
    %c0_i32_0 = arith.constant 0 : i32
    return %arg1, %c0_i32 : i32, i32
  }
  func.func @transform_5(%arg0: i32, %arg1: i32) -> (i32, i32) {
    %c0_i32 = arith.constant 0 : i32
    %c0_i32_0 = arith.constant 0 : i32
    %c0_i32_1 = arith.constant 0 : i32
    return %c0_i32, %c0_i32_0 : i32, i32
  }
  func.func @transform_6(%arg0: i32, %arg1: i32) -> (i32, i32, i32) {
    %c0_i32 = arith.constant 0 : i32
    %c0_i32_0 = arith.constant 0 : i32
    %c0_i32_1 = arith.constant 0 : i32
    return %arg0, %c0_i32, %c0_i32_0 : i32, i32, i32
  }
}

</mosaic_0001>

<llo_original>
// kernel: tpu_custom_call.1
$region0: #{tpu_custom_call.1}
  #allocation0 [shape = 'u32[]', space=smem, size = 0x4, offset = 0x4, fixed_abs, tag = 'smem constant byte address 0x4 - core index']
  #allocation1 [shape = 'u32[144,128]{1,0:T(1,128)}', space=vmem, size = 0x12000, scoped, tag = 'internal scratch']
  #allocation2 [shape = 'bf16[32,32]{1,0:T(8,128)(2,1)}', space=vmem, size = 0x2000, scoped, tag = 'scratch operand']
  #allocation3 [shape = 'f32[32,256]{1,0:T(8,128)}', space=vmem, size = 0x8000, scoped, tag = 'scratch operand']
  %s0 = inlined_call_operand.vmem [shape: f32[16,64], index: 0, kind: input, shape index: {}]
  %s1 = inlined_call_operand.vmem [shape: f32[4,64,32], index: 1, kind: input, shape index: {}]
  %s2 = inlined_call_operand.vmem [shape: bf16[32,256], index: 2, kind: input, shape index: {}]
  %s3 = inlined_call_operand.vmem [shape: f32[1,256], index: 3, kind: input, shape index: {}]
  %s4 = inlined_call_operand.vmem [shape: bf16[256,256], index: 4, kind: input, shape index: {}]
  %s5 = inlined_call_operand.vmem [shape: f32[1,256], index: 5, kind: input, shape index: {}]
  %s6 = inlined_call_operand.hbm [shape: bf16[4,16,256], index: 6, kind: output, shape index: {}]
  %s7 = sld [smem:[#allocation0]]
  $region106: #{tpu_custom_call.1} parent=0
    _
  %s9 = ssub.s32 1, %s7
  %s10 = scalar_select 0, %s9, %s7
  $region1: #{tpu_custom_call.1} parent=0
    #allocation4 [shape = 'u8[16384]{0}', space=vmem, size = 0x4000, scoped, tag = 'input window, operand 2']
    #allocation5 [shape = 'u8[32768]{0}', space=vmem, size = 0x8000, scoped, tag = 'output window, operand 0']
    #allocation6 [shape = 's32[2]{0}', space=sflag, size = 0x8, scoped, tag = 'scoped memory for tpu_custom_call.1']
    %11 = vsyncpa [#allocation6], 0
    %s12 = scalar_lea.sflag [#allocation6], 1
    %13 = vsyncpa %s12, 0
    loop: start=0, step=1, limit=6
    $region2: #{tpu_custom_call.1} parent=1 // loop_pre_header
      _
    $region3: #{tpu_custom_call.1} parent=1 // loop_header
      %s15 = sphi 0, %s19
      %p16 = scmp.ge.s32.totalorder %s15, 6
      %s22 = sphi 0, %s34
      %s23 = sphi 0, %s30
      %s24 = sphi 0, %s22
      %s25 = sphi 0, %s23
      %s26 = sphi 0, %s24
      %s27 = sphi 0, %s25
      %s35 = sphi 0, %s35
      %s37 = sphi 0, %s35
      %s38 = sphi 0, %s37
      %s52 = sphi 0, %s38
      %s58 = sphi 0, %s60
      %s61 = sphi 0, %s58
      %s62 = sphi 0, %s61
      %s78 = sphi 0, %s62
      %s84 = sphi 0, %s86
      %s87 = sphi 0, %s84
      %s88 = sphi 0, %s87
      %s104 = sphi 0, %s88
      %s110 = sphi 0, %s112
      %s113 = sphi 0, %s110
      %s114 = sphi 0, %s113
      %s130 = sphi 0, %s114
      %s136 = sphi 0, %s138
      %s139 = sphi 0, %s136
      %s140 = sphi 0, %s139
      %s156 = sphi 0, %s140
      %s160 = sphi 0, %s160
      %s162 = sphi 0, %s160
      %s163 = sphi 0, %s162
      %s177 = sphi 0, %s163
      %s183 = sphi 0, %s185
      %s186 = sphi 0, %s183
      %s187 = sphi 0, %s186
      %s203 = sphi 0, %s187
    $region4: #{tpu_custom_call.1} parent=1 // loop_header_branch
      %18 = sbr.rel (%p16) target = $region8
    $region5: #{tpu_custom_call.1} parent=1 // loop_body
      %s20 = ssub.s32 %s15, 1
      %s21 = ssub.s32 %s15, 2
      %s28 = sadd.s32 1, %s23
      %p29 = scmp.ge.s32.totalorder %s28, 2
      %s30 = scalar_select %p29, 0, %s28
      %s31 = sadd.s32 1, %s22
      %s32 = scalar_select %p29, %s31, %s22
      %p33 = scmp.ge.s32.totalorder %s32, 2
      %s34 = scalar_select %p33, 0, %s32
      %s36 = sadd.s32 %s35, 1
      %p39 = scmp.eq.s32.totalorder %s15, 3
      %p40 = scmp.ne.s32.totalorder %s35, %s37
      %p41 = scmp.eq.s32.totalorder %s15, 0
      %p42 = por %p40, %p41
      %p43 = scmp.ne.s32.totalorder %s35, %s37
      %p44 = scmp.eq.s32.totalorder %s20, 3
      %p45 = por %p43, %p44
      %p46 = scmp.ne.s32.totalorder %s37, %s38
      %p47 = scmp.eq.s32.totalorder %s20, 0
      %p48 = por %p46, %p47
      %p49 = scmp.ne.s32.totalorder %s37, %s38
      %p50 = scmp.eq.s32.totalorder %s21, 3
      %p51 = por %p49, %p50
      %p53 = scmp.ne.s32.totalorder %s38, %s52
      %p54 = scmp.eq.s32.totalorder %s21, 0
      %p55 = por %p53, %p54
      %s56 = ssub.s32 %s22, %s34
      %p57 = scmp.eq.s32.totalorder %s56, 0
      %s59 = sadd.s32 %s58, 1
      %s60 = scalar_select %p57, %s58, %s59
      %p63 = pneg %p57
      %p64 = scmp.eq.s32.totalorder %s15, 3
      %p65 = por %p63, %p64
      %p66 = scmp.ne.s32.totalorder %s58, %s61
      %p67 = scmp.eq.s32.totalorder %s15, 0
      %p68 = por %p66, %p67
      %p69 = scmp.ne.s32.totalorder %s58, %s61
      %p70 = scmp.eq.s32.totalorder %s20, 3
      %p71 = por %p69, %p70
      %p72 = scmp.ne.s32.totalorder %s61, %s62
      %p73 = scmp.eq.s32.totalorder %s20, 0
      %p74 = por %p72, %p73
      %p75 = scmp.ne.s32.totalorder %s61, %s62
      %p76 = scmp.eq.s32.totalorder %s21, 3
      %p77 = por %p75, %p76
      %p79 = scmp.ne.s32.totalorder %s62, %s78
      %p80 = scmp.eq.s32.totalorder %s21, 0
      %p81 = por %p79, %p80
      %s82 = ssub.s32 %s23, %s30
      %p83 = scmp.eq.s32.totalorder %s82, 0
      %s85 = sadd.s32 %s84, 1
      %s86 = scalar_select %p83, %s84, %s85
      %p89 = pneg %p83
      %p90 = scmp.eq.s32.totalorder %s15, 3
      %p91 = por %p89, %p90
      %p92 = scmp.ne.s32.totalorder %s84, %s87
      %p93 = scmp.eq.s32.totalorder %s15, 0
      %p94 = por %p92, %p93
      %p95 = scmp.ne.s32.totalorder %s84, %s87
      %p96 = scmp.eq.s32.totalorder %s20, 3
      %p97 = por %p95, %p96
      %p98 = scmp.ne.s32.totalorder %s87, %s88
      %p99 = scmp.eq.s32.totalorder %s20, 0
      %p100 = por %p98, %p99
      %p101 = scmp.ne.s32.totalorder %s87, %s88
      %p102 = scmp.eq.s32.totalorder %s21, 3
      %p103 = por %p101, %p102
      %p105 = scmp.ne.s32.totalorder %s88, %s104
      %p106 = scmp.eq.s32.totalorder %s21, 0
      %p107 = por %p105, %p106
      %s108 = ssub.s32 %s23, %s30
      %p109 = scmp.eq.s32.totalorder %s108, 0
      %s111 = sadd.s32 %s110, 1
      %s112 = scalar_select %p109, %s110, %s111
      %p115 = pneg %p109
      %p116 = scmp.eq.s32.totalorder %s15, 3
      %p117 = por %p115, %p116
      %p118 = scmp.ne.s32.totalorder %s110, %s113
      %p119 = scmp.eq.s32.totalorder %s15, 0
      %p120 = por %p118, %p119
      %p121 = scmp.ne.s32.totalorder %s110, %s113
      %p122 = scmp.eq.s32.totalorder %s20, 3
      %p123 = por %p121, %p122
      %p124 = scmp.ne.s32.totalorder %s113, %s114
      %p125 = scmp.eq.s32.totalorder %s20, 0
      %p126 = por %p124, %p125
      %p127 = scmp.ne.s32.totalorder %s113, %s114
      %p128 = scmp.eq.s32.totalorder %s21, 3
      %p129 = por %p127, %p128
      %p131 = scmp.ne.s32.totalorder %s114, %s130
      %p132 = scmp.eq.s32.totalorder %s21, 0
      %p133 = por %p131, %p132
      %s134 = ssub.s32 %s23, %s30
      %p135 = scmp.eq.s32.totalorder %s134, 0
      %s137 = sadd.s32 %s136, 1
      %s138 = scalar_select %p135, %s136, %s137
      %p141 = pneg %p135
      %p142 = scmp.eq.s32.totalorder %s15, 3
      %p143 = por %p141, %p142
      %p144 = scmp.ne.s32.totalorder %s136, %s139
      %p145 = scmp.eq.s32.totalorder %s15, 0
      %p146 = por %p144, %p145
      %p147 = scmp.ne.s32.totalorder %s136, %s139
      %p148 = scmp.eq.s32.totalorder %s20, 3
      %p149 = por %p147, %p148
      %p150 = scmp.ne.s32.totalorder %s139, %s140
      %p151 = scmp.eq.s32.totalorder %s20, 0
      %p152 = por %p150, %p151
      %p153 = scmp.ne.s32.totalorder %s139, %s140
      %p154 = scmp.eq.s32.totalorder %s21, 3
      %p155 = por %p153, %p154
      %p157 = scmp.ne.s32.totalorder %s140, %s156
      %p158 = scmp.eq.s32.totalorder %s21, 0
      %p159 = por %p157, %p158
      %s161 = sadd.s32 %s160, 1
      %p164 = scmp.eq.s32.totalorder %s15, 3
      %p165 = scmp.ne.s32.totalorder %s160, %s162
      %p166 = scmp.eq.s32.totalorder %s15, 0
      %p167 = por %p165, %p166
      %p168 = scmp.ne.s32.totalorder %s160, %s162
      %p169 = scmp.eq.s32.totalorder %s20, 3
      %p170 = por %p168, %p169
      %p171 = scmp.ne.s32.totalorder %s162, %s163
      %p172 = scmp.eq.s32.totalorder %s20, 0
      %p173 = por %p171, %p172
      %p174 = scmp.ne.s32.totalorder %s162, %s163
      %p175 = scmp.eq.s32.totalorder %s21, 3
      %p176 = por %p174, %p175
      %p178 = scmp.ne.s32.totalorder %s163, %s177
      %p179 = scmp.eq.s32.totalorder %s21, 0
      %p180 = por %p178, %p179
      %s181 = ssub.s32 %s22, %s34
      %p182 = scmp.eq.s32.totalorder %s181, 0
      %s184 = sadd.s32 %s183, 1
      %s185 = scalar_select %p182, %s183, %s184
      %p188 = pneg %p182
      %p189 = scmp.eq.s32.totalorder %s15, 3
      %p190 = por %p188, %p189
      %p191 = scmp.ne.s32.totalorder %s183, %s186
      %p192 = scmp.eq.s32.totalorder %s15, 0
      %p193 = por %p191, %p192
      %p194 = scmp.ne.s32.totalorder %s183, %s186
      %p195 = scmp.eq.s32.totalorder %s20, 3
      %p196 = por %p194, %p195
      %p197 = scmp.ne.s32.totalorder %s186, %s187
      %p198 = scmp.eq.s32.totalorder %s20, 0
      %p199 = por %p197, %p198
      %p200 = scmp.ne.s32.totalorder %s186, %s187
      %p201 = scmp.eq.s32.totalorder %s21, 3
      %p202 = por %p200, %p201
      %p204 = scmp.ne.s32.totalorder %s187, %s203
      %p205 = scmp.eq.s32.totalorder %s21, 0
      %p206 = por %p204, %p205
      %p207 = scmp.le.s32.totalorder 1, %s15
      %p208 = scmp.lt.s32.totalorder %s15, 5
      %p209 = pnand %p207, %p208
      %p210 = pneg %p209
      // Predicated region
      $region9: #{tpu_custom_call.1} parent=5 // pred_check
        _
      $region10: #{tpu_custom_call.1} parent=5 // pred_check_branch
        %212 = sbr.rel (%p209) target = $region12
      $region11: #{tpu_custom_call.1} parent=5 // pred_region
        %s213 = ssub.s32 %s15, 1
        // Predicated region
        $region13: #{tpu_custom_call.1} parent=11 // pred_check
          %p214 = pneg %p48
        $region14: #{tpu_custom_call.1} parent=11 // pred_check_branch
          %216 = sbr.rel (%p214) target = $region16
        $region15: #{tpu_custom_call.1} parent=11 // pred_region
          _
        $region16: #{tpu_custom_call.1} parent=11 // pred_fallthru
          _
        // Predicated region
        $region17: #{tpu_custom_call.1} parent=11 // pred_check
          %p217 = pneg %p173
        $region18: #{tpu_custom_call.1} parent=11 // pred_check_branch
          %219 = sbr.rel (%p217) target = $region20
        $region19: #{tpu_custom_call.1} parent=11 // pred_region
          _
        $region20: #{tpu_custom_call.1} parent=11 // pred_fallthru
          _
      $region12: #{tpu_custom_call.1} parent=5 // pred_fallthru
        _
      %p220 = scmp.lt.s32.totalorder %s15, 4
      // Predicated region
      $region21: #{tpu_custom_call.1} parent=5 // pred_check
        %p221 = pneg %p220
      $region22: #{tpu_custom_call.1} parent=5 // pred_check_branch
        %223 = sbr.rel (%p221) target = $region24
      $region23: #{tpu_custom_call.1} parent=5 // pred_region
        // Predicated region
        $region25: #{tpu_custom_call.1} parent=23 // pred_check
          %p224 = pneg %p68
        $region26: #{tpu_custom_call.1} parent=23 // pred_check_branch
          %226 = sbr.rel (%p224) target = $region28
        $region27: #{tpu_custom_call.1} parent=23 // pred_region
          %s227 = smul.u32 2, %s22
          %p228 = scmp.lt.s32.totalorder %s227, 3
          %s229 = scalar_select %p228, %s227, 3
          %s230 = smul.addr %s229, 8
          %s231 = smul.addr %s230, 8
          %s232 = scalar_lea.vmem %s1, %s231
          %s233 = smul.u32 2, %s22
        $region28: #{tpu_custom_call.1} parent=23 // pred_fallthru
          _
        // Predicated region
        $region29: #{tpu_custom_call.1} parent=23 // pred_check
          %p234 = pneg %p94
        $region30: #{tpu_custom_call.1} parent=23 // pred_check_branch
          %236 = sbr.rel (%p234) target = $region32
        $region31: #{tpu_custom_call.1} parent=23 // pred_region
          %s237 = sand.u32 %s84, 1
          %s238 = sand.u32 %s84, 1
          %s239 = smul.addr %s238, 16
          %s240 = scalar_lea.vmem [#allocation4], %s239
          %s241 = smul.addr %s23, 4
          %s242 = scalar_lea.vmem %s2, %s241
          // Predicated region
          $region33: #{tpu_custom_call.1} parent=31 // pred_check
            _
          $region34: #{tpu_custom_call.1} parent=31 // pred_check_branch
            %244 = sbr.rel (0) target = $region36
          $region35: #{tpu_custom_call.1} parent=31 // pred_region
            // Predicated region
            $region37: #{tpu_custom_call.1} parent=35 // pred_check
              _
            $region38: #{tpu_custom_call.1} parent=35 // pred_check_branch
              %246 = sbr.rel target = $region40
            $region39: #{tpu_custom_call.1} parent=35 // pred_region
              // Predicated region
              $region52: #{tpu_custom_call.1} parent=39 // pred_check
                _
              $region53: #{tpu_custom_call.1} parent=39 // pred_check_branch
                %268 = sbr.rel (0) target = $region55
              $region54: #{tpu_custom_call.1} parent=39 // pred_region
                loop: start=0, step=1, limit=1
                $region56: #{tpu_custom_call.1} parent=54 // loop_pre_header
                  _
                $region57: #{tpu_custom_call.1} parent=54 // loop_header
                  %s270 = sphi 0, %s274
                  %p271 = scmp.ge.s32.totalorder %s270, 1
                  %s275 = sphi %s242, %s242
                  %s276 = sphi %s240, %s240
                $region58: #{tpu_custom_call.1} parent=54 // loop_header_branch
                  %273 = sbr.rel (%p271) target = $region62
                $region59: #{tpu_custom_call.1} parent=54 // loop_body
                  _
                $region60: #{tpu_custom_call.1} parent=54 // loop_footer
                  %s274 = sadd.s32 1, %s270
                $region61: #{tpu_custom_call.1} parent=54 // loop_footer_branch
                  %269 = sbr.rel target = $region57
                $region62: #{tpu_custom_call.1} parent=54 // loop_exit
                  _
                %s278 = ssub.s32 16, 1
                loop: start=0, step=1, limit=1
                $region63: #{tpu_custom_call.1} parent=54 // loop_pre_header
                  _
                $region64: #{tpu_custom_call.1} parent=54 // loop_header
                  %s280 = sphi 0, %s284
                  %p281 = scmp.ge.s32.totalorder %s280, 1
                  %s285 = sphi %s242, %s242
                  %s286 = sphi %s240, %s240
                $region65: #{tpu_custom_call.1} parent=54 // loop_header_branch
                  %283 = sbr.rel (%p281) target = $region69
                $region66: #{tpu_custom_call.1} parent=54 // loop_body
                  %v287 = vld [vmem:[%s285] sm:%s278]
                  %288 = vst [vmem:[%s286] sm:%s278] %v287
                  %v289 = vld [vmem:[%s285 + $0x8] sm:%s278]
                  %290 = vst [vmem:[%s286 + $0x4] sm:%s278] %v289
                  %v291 = vld [vmem:[%s285 + $0x10] sm:%s278]
                  %292 = vst [vmem:[%s286 + $0x8] sm:%s278] %v291
                  %v293 = vld [vmem:[%s285 + $0x18] sm:%s278]
                  %294 = vst [vmem:[%s286 + $0xc] sm:%s278] %v293
                $region67: #{tpu_custom_call.1} parent=54 // loop_footer
                  %s284 = sadd.s32 1, %s280
                $region68: #{tpu_custom_call.1} parent=54 // loop_footer_branch
                  %279 = sbr.rel target = $region64
                $region69: #{tpu_custom_call.1} parent=54 // loop_exit
                  _
              $region55: #{tpu_custom_call.1} parent=39 // pred_fallthru
                _
            $region40: #{tpu_custom_call.1} parent=35 // pred_fallthru
              _
            // Predicated region
            $region41: #{tpu_custom_call.1} parent=35 // pred_check
              _
            $region42: #{tpu_custom_call.1} parent=35 // pred_check_branch
              %248 = sbr.rel (0) target = $region44
            $region43: #{tpu_custom_call.1} parent=35 // pred_region
              %s250 = ssub.s32 16, 1
              loop: start=0, step=1, limit=1
              $region45: #{tpu_custom_call.1} parent=43 // loop_pre_header
                _
              $region46: #{tpu_custom_call.1} parent=43 // loop_header
                %s252 = sphi 0, %s256
                %p253 = scmp.ge.s32.totalorder %s252, 1
                %s257 = sphi %s242, %s242
                %s258 = sphi %s240, %s240
              $region47: #{tpu_custom_call.1} parent=43 // loop_header_branch
                %255 = sbr.rel (%p253) target = $region51
              $region48: #{tpu_custom_call.1} parent=43 // loop_body
                %v259 = vld [vmem:[%s257] sm:%s250]
                %260 = vst [vmem:[%s258] sm:%s250] %v259
                %v261 = vld [vmem:[%s257 + $0x8] sm:%s250]
                %262 = vst [vmem:[%s258 + $0x4] sm:%s250] %v261
                %v263 = vld [vmem:[%s257 + $0x10] sm:%s250]
                %264 = vst [vmem:[%s258 + $0x8] sm:%s250] %v263
                %v265 = vld [vmem:[%s257 + $0x18] sm:%s250]
                %266 = vst [vmem:[%s258 + $0xc] sm:%s250] %v265
              $region49: #{tpu_custom_call.1} parent=43 // loop_footer
                %s256 = sadd.s32 1, %s252
              $region50: #{tpu_custom_call.1} parent=43 // loop_footer_branch
                %251 = sbr.rel target = $region46
              $region51: #{tpu_custom_call.1} parent=43 // loop_exit
                _
            $region44: #{tpu_custom_call.1} parent=35 // pred_fallthru
              _
          $region36: #{tpu_custom_call.1} parent=31 // pred_fallthru
            _
          %295 = vnop
        $region32: #{tpu_custom_call.1} parent=23 // pred_fallthru
          _
        // Predicated region
        $region70: #{tpu_custom_call.1} parent=23 // pred_check
          %p296 = pneg %p120
        $region71: #{tpu_custom_call.1} parent=23 // pred_check_branch
          %298 = sbr.rel (%p296) target = $region73
        $region72: #{tpu_custom_call.1} parent=23 // pred_region
          %p299 = scmp.lt.s32.totalorder %s23, 1
          %s300 = scalar_select %p299, %s23, 1
          %s301 = scalar_lea.vmem %s3, %s300
        $region73: #{tpu_custom_call.1} parent=23 // pred_fallthru
          _
        // Predicated region
        $region74: #{tpu_custom_call.1} parent=23 // pred_check
          %p302 = pneg %p146
        $region75: #{tpu_custom_call.1} parent=23 // pred_check_branch
          %304 = sbr.rel (%p302) target = $region77
        $region76: #{tpu_custom_call.1} parent=23 // pred_region
          %s305 = smul.u32 16, %s23
          %p306 = scmp.lt.s32.totalorder %s305, 31
          %s307 = scalar_select %p306, %s305, 31
          %s308 = smul.addr %s307, 2
          %s309 = smul.addr %s308, 4
          %s310 = scalar_lea.vmem %s4, %s309
          %s311 = smul.u32 16, %s23
        $region77: #{tpu_custom_call.1} parent=23 // pred_fallthru
          _
      $region24: #{tpu_custom_call.1} parent=5 // pred_fallthru
        _
      %p312 = scmp.le.s32.totalorder 1, %s15
      %p313 = scmp.lt.s32.totalorder %s15, 5
      %p314 = pnand %p312, %p313
      %p315 = pneg %p314
      // Predicated region
      $region78: #{tpu_custom_call.1} parent=5 // pred_check
        _
      $region79: #{tpu_custom_call.1} parent=5 // pred_check_branch
        %317 = sbr.rel (%p314) target = $region81
      $region80: #{tpu_custom_call.1} parent=5 // pred_region
        %s318 = ssub.s32 %s15, 1
        %s319 = sand.u32 %s87, 1
        %s320 = sand.u32 %s87, 1
        %s321 = smul.addr %s320, 16
        %s322 = scalar_lea.vmem [#allocation4], %s321
        // Predicated region
        $region82: #{tpu_custom_call.1} parent=80 // pred_check
          %p323 = pneg %p100
        $region83: #{tpu_custom_call.1} parent=80 // pred_check_branch
          %325 = sbr.rel (%p323) target = $region85
        $region84: #{tpu_custom_call.1} parent=80 // pred_region
          _
        $region85: #{tpu_custom_call.1} parent=80 // pred_fallthru
          _
        %p326 = pneg %p48
        %p327 = pneg %p45
        %s328 = smul.u32 2, %s24
        %p329 = scmp.lt.s32.totalorder %s328, 3
        %s330 = scalar_select %p329, %s328, 3
        %s331 = smul.addr %s330, 8
        %s332 = smul.addr %s331, 8
        %s333 = scalar_lea.vmem %s1, %s332
        %p334 = pneg %p74
        %p335 = pneg %p71
        %s336 = sand.u32 %s87, 1
        %s337 = sand.u32 %s87, 1
        %s338 = smul.addr %s337, 16
        %s339 = scalar_lea.vmem [#allocation4], %s338
        %p340 = pneg %p100
        %p341 = pneg %p97
        %p342 = scmp.lt.s32.totalorder %s25, 1
        %s343 = scalar_select %p342, %s25, 1
        %s344 = scalar_lea.vmem %s3, %s343
        %p345 = pneg %p126
        %p346 = pneg %p123
        %s347 = smul.u32 16, %s25
        %p348 = scmp.lt.s32.totalorder %s347, 31
        %s349 = scalar_select %p348, %s347, 31
        %s350 = smul.addr %s349, 2
        %s351 = smul.addr %s350, 4
        %s352 = scalar_lea.vmem %s4, %s351
        %p353 = pneg %p152
        %p354 = pneg %p149
        %p355 = pneg %p173
        %p356 = pneg %p170
        %p357 = pneg %p199
        %p358 = pneg %p196
        %s359 = sand.u32 %s186, 1
        %s360 = scalar_lea.sflag [#allocation6], %s359
        %s361 = sand.u32 %s186, 1
        %s362 = smul.addr %s361, 32
        %s363 = scalar_lea.vmem [#allocation5], %s362
        %s364 = smul.u32 2, %s24
        %p365 = scmp.lt.s32.totalorder %s364, 3
        %s366 = scalar_select %p365, %s364, 3
        %s367 = smul.addr %s366, 8
        %s368 = smul.addr %s367, 8
        %s369 = scalar_lea.vmem %s1, %s368
        %s370 = smul.u32 2, %s24
        %p371 = scmp.lt.s32.totalorder %s25, 1
        %s372 = scalar_select %p371, %s25, 1
        %s373 = scalar_lea.vmem %s3, %s372
        %s374 = smul.u32 16, %s25
        %p375 = scmp.lt.s32.totalorder %s374, 31
        %s376 = scalar_select %p375, %s374, 31
        %s377 = smul.addr %s376, 2
        %s378 = smul.addr %s377, 4
        %s379 = scalar_lea.vmem %s4, %s378
        %s380 = smul.u32 16, %s25
        %s381 = smul.u32 2, %s24
        %p383 = scmp.eq.s32.totalorder %s25, 0
        // Predicated region
        $region86: #{tpu_custom_call.1} parent=80 // pred_check
          %p384 = pneg %p383
        $region87: #{tpu_custom_call.1} parent=80 // pred_check_branch
          %386 = sbr.rel (%p384) target = $region89
        $region88: #{tpu_custom_call.1} parent=80 // pred_region
          %v387 = vld [vmem:[%s0] sm:$0xff]
          %v388 = vld [vmem:[%s0 + $0x8] sm:$0xff]
          %v389 = vld [vmem:[%s369] sm:$0xff]
          %v390 = vld [vmem:[%s369 + $0x8] sm:$0xff]
          %v391 = vld [vmem:[%s369 + $0x10] sm:$0xff]
          %v392 = vld [vmem:[%s369 + $0x18] sm:$0xff]
          %v393 = vld [vmem:[%s369 + $0x20] sm:$0xff]
          %v394 = vld [vmem:[%s369 + $0x28] sm:$0xff]
          %v395 = vld [vmem:[%s369 + $0x30] sm:$0xff]
          %v396 = vld [vmem:[%s369 + $0x38] sm:$0xff]
          %vm397 = vcmask 523264
          %v399 = vsel %vm397, %v387, 0
          %v402 = vsel %vm397, %v388, 0
          %404 = vmatprep.subr.mxu0 0.0
          %405 = vmatpush1.msra.mxu0 0.0
          %406 = vmatprep.subr.mxu0 0.0
          %407 = vmatpush1.msra.mxu0 0.0
          %408 = vmatprep.subr.mxu0 0.0
          %409 = vmatpush1.msra.mxu0 0.0
          %410 = vmatprep.subr.mxu0 0.0
          %411 = vmatpush1.msra.mxu0 0.0
          %412 = vmatprep.subr.mxu0 0.0
          %413 = vmatpush1.msra.mxu0 0.0
          %414 = vmatprep.subr.mxu0 0.0
          %415 = vmatpush1.msra.mxu0 0.0
          %416 = vmatprep.subr.mxu0 0.0
          %417 = vmatpush1.msra.mxu0 0.0
          %418 = vmatprep.subr.mxu0 0.0
          %419 = vmatpush1.msra.mxu0 0.0
          %420 = vmatprep.subr.mxu0 0.0
          %421 = vmatpush1.msra.mxu0 %v396
          %422 = vmatprep.subr.mxu0 0.0
          %423 = vmatpush1.msra.mxu0 %v395
          %424 = vmatprep.subr.mxu0 0.0
          %425 = vmatpush1.msra.mxu0 %v394
          %426 = vmatprep.subr.mxu0 0.0
          %427 = vmatpush1.msra.mxu0 %v393
          %428 = vmatprep.subr.mxu0 0.0
          %429 = vmatpush1.msra.mxu0 %v392
          %430 = vmatprep.subr.mxu0 0.0
          %431 = vmatpush1.msra.mxu0 %v391
          %432 = vmatprep.subr.mxu0 0.0
          %433 = vmatpush1.msra.mxu0 %v390
          %434 = vmatprep.subr.mxu0 0.0
          %435 = vmatpush1.msra.mxu0 %v389
          %436 = vmatprep.subr.mxu0 0.0
          %437 = vmatpush2.msra.mxu0 0.0
          %438 = vmatprep.subr.mxu0 0.0
          %439 = vmatpush2.msra.mxu0 0.0
          %440 = vmatprep.subr.mxu0 0.0
          %441 = vmatpush2.msra.mxu0 0.0
          %442 = vmatprep.subr.mxu0 0.0
          %443 = vmatpush2.msra.mxu0 0.0
          %444 = vmatprep.subr.mxu0 0.0
          %445 = vmatpush2.msra.mxu0 0.0
          %446 = vmatprep.subr.mxu0 0.0
          %447 = vmatpush2.msra.mxu0 0.0
          %448 = vmatprep.subr.mxu0 0.0
          %449 = vmatpush2.msra.mxu0 0.0
          %450 = vmatprep.subr.mxu0 0.0
          %451 = vmatpush2.msra.mxu0 0.0
          %452 = vmatprep.subr.mxu0 0.0
          %453 = vmatpush2.msra.mxu0 0.0
          %454 = vmatprep.subr.mxu0 0.0
          %455 = vmatpush2.msra.mxu0 0.0
          %456 = vmatprep.subr.mxu0 0.0
          %457 = vmatpush2.msra.mxu0 0.0
          %458 = vmatprep.subr.mxu0 0.0
          %459 = vmatpush2.msra.mxu0 0.0
          %460 = vmatprep.subr.mxu0 0.0
          %461 = vmatpush2.msra.mxu0 0.0
          %462 = vmatprep.subr.mxu0 0.0
          %463 = vmatpush2.msra.mxu0 0.0
          %464 = vmatprep.subr.mxu0 0.0
          %465 = vmatpush2.msra.mxu0 0.0
          %466 = vmatprep.subr.mxu0 0.0
          %467 = vmatpush2.msra.mxu0 0.0
          %468 = vmatprep.mubr.f32.mxu0 0.0
          %469 = vmatmul.mubr.f32.gmra.mxu0 %v399
          %v470 = vpop.f32.mrf.mxu0
          %v471 = vadd.f32 0.0, %v470
          %v472 = vpop.f32.mrf.mxu0
          %473 = vmatprep.mubr.f32.mxu0 0.0
          %474 = vmatmul.mubr.f32.gmra.mxu0 %v402
          %v475 = vpop.f32.mrf.mxu0
          %v476 = vadd.f32 0.0, %v475
          %v477 = vpop.f32.mrf.mxu0
          %478 = vdwg.mxu0
          %v479 = vpack.c.bf16 %v476, %v471
          %v481 = vunpack.c.l.b16 %v479
          %v482 = vunpack.c.h.b16 %v479
          %v483 = vpack.c.b16 %v481, %v481
          %v484 = vpack.c.b16 %v482, %v482
          %vm487 = vcmask 257024
          %488 = vst.msk [vmem:[#allocation2] sm:$0xf] %vm487, %v483
          %489 = vst.msk [vmem:[#allocation2 + $0x4] sm:$0xf] %vm487, %v484
          %v490 = vld [vmem:[%s0] sm:$0xff]
          %v491 = vld [vmem:[%s0 + $0x8] sm:$0xff]
          %s492 = scalar_lea.vmem %s369, 64
          %v493 = vld [vmem:[%s492] sm:$0xff]
          %v494 = vld [vmem:[%s492 + $0x8] sm:$0xff]
          %v495 = vld [vmem:[%s492 + $0x10] sm:$0xff]
          %v496 = vld [vmem:[%s492 + $0x18] sm:$0xff]
          %v497 = vld [vmem:[%s492 + $0x20] sm:$0xff]
          %v498 = vld [vmem:[%s492 + $0x28] sm:$0xff]
          %v499 = vld [vmem:[%s492 + $0x30] sm:$0xff]
          %v500 = vld [vmem:[%s492 + $0x38] sm:$0xff]
          %v502 = vsel %vm397, %v490, 0
          %v505 = vsel %vm397, %v491, 0
          %507 = vmatprep.subr.mxu0 0.0
          %508 = vmatpush1.msra.mxu0 0.0
          %509 = vmatprep.subr.mxu0 0.0
          %510 = vmatpush1.msra.mxu0 0.0
          %511 = vmatprep.subr.mxu0 0.0
          %512 = vmatpush1.msra.mxu0 0.0
          %513 = vmatprep.subr.mxu0 0.0
          %514 = vmatpush1.msra.mxu0 0.0
          %515 = vmatprep.subr.mxu0 0.0
          %516 = vmatpush1.msra.mxu0 0.0
          %517 = vmatprep.subr.mxu0 0.0
          %518 = vmatpush1.msra.mxu0 0.0
          %519 = vmatprep.subr.mxu0 0.0
          %520 = vmatpush1.msra.mxu0 0.0
          %521 = vmatprep.subr.mxu0 0.0
          %522 = vmatpush1.msra.mxu0 0.0
          %523 = vmatprep.subr.mxu0 0.0
          %524 = vmatpush1.msra.mxu0 %v500
          %525 = vmatprep.subr.mxu0 0.0
          %526 = vmatpush1.msra.mxu0 %v499
          %527 = vmatprep.subr.mxu0 0.0
          %528 = vmatpush1.msra.mxu0 %v498
          %529 = vmatprep.subr.mxu0 0.0
          %530 = vmatpush1.msra.mxu0 %v497
          %531 = vmatprep.subr.mxu0 0.0
          %532 = vmatpush1.msra.mxu0 %v496
          %533 = vmatprep.subr.mxu0 0.0
          %534 = vmatpush1.msra.mxu0 %v495
          %535 = vmatprep.subr.mxu0 0.0
          %536 = vmatpush1.msra.mxu0 %v494
          %537 = vmatprep.subr.mxu0 0.0
          %538 = vmatpush1.msra.mxu0 %v493
          %539 = vmatprep.subr.mxu0 0.0
          %540 = vmatpush2.msra.mxu0 0.0
          %541 = vmatprep.subr.mxu0 0.0
          %542 = vmatpush2.msra.mxu0 0.0
          %543 = vmatprep.subr.mxu0 0.0
          %544 = vmatpush2.msra.mxu0 0.0
          %545 = vmatprep.subr.mxu0 0.0
          %546 = vmatpush2.msra.mxu0 0.0
          %547 = vmatprep.subr.mxu0 0.0
          %548 = vmatpush2.msra.mxu0 0.0
          %549 = vmatprep.subr.mxu0 0.0
          %550 = vmatpush2.msra.mxu0 0.0
          %551 = vmatprep.subr.mxu0 0.0
          %552 = vmatpush2.msra.mxu0 0.0
          %553 = vmatprep.subr.mxu0 0.0
          %554 = vmatpush2.msra.mxu0 0.0
          %555 = vmatprep.subr.mxu0 0.0
          %556 = vmatpush2.msra.mxu0 0.0
          %557 = vmatprep.subr.mxu0 0.0
          %558 = vmatpush2.msra.mxu0 0.0
          %559 = vmatprep.subr.mxu0 0.0
          %560 = vmatpush2.msra.mxu0 0.0
          %561 = vmatprep.subr.mxu0 0.0
          %562 = vmatpush2.msra.mxu0 0.0
          %563 = vmatprep.subr.mxu0 0.0
          %564 = vmatpush2.msra.mxu0 0.0
          %565 = vmatprep.subr.mxu0 0.0
          %566 = vmatpush2.msra.mxu0 0.0
          %567 = vmatprep.subr.mxu0 0.0
          %568 = vmatpush2.msra.mxu0 0.0
          %569 = vmatprep.subr.mxu0 0.0
          %570 = vmatpush2.msra.mxu0 0.0
          %571 = vmatprep.mubr.f32.mxu0 0.0
          %572 = vmatmul.mubr.f32.gmra.mxu0 %v502
          %v573 = vpop.f32.mrf.mxu0
          %v574 = vadd.f32 0.0, %v573
          %v575 = vpop.f32.mrf.mxu0
          %576 = vmatprep.mubr.f32.mxu0 0.0
          %577 = vmatmul.mubr.f32.gmra.mxu0 %v505
          %v578 = vpop.f32.mrf.mxu0
          %v579 = vadd.f32 0.0, %v578
          %v580 = vpop.f32.mrf.mxu0
          %581 = vdwg.mxu0
          %v582 = vpack.c.bf16 %v579, %v574
          %v584 = vunpack.c.l.b16 %v582
          %v585 = vunpack.c.h.b16 %v582
          %v586 = vpack.c.b16 %v584, %v584
          %v587 = vpack.c.b16 %v585, %v585
          %590 = vst.msk [vmem:[#allocation2 + $0x8] sm:$0xf] %vm487, %v586
          %591 = vst.msk [vmem:[#allocation2 + $0xc] sm:$0xf] %vm487, %v587
          %592 = vst [vmem:[#allocation3] sm:$0xff] 0.0
          %593 = vst [vmem:[#allocation3 + $0x8] sm:$0xff] 0.0
          %594 = vst [vmem:[#allocation3 + $0x10] sm:$0xff] 0.0
          %595 = vst [vmem:[#allocation3 + $0x18] sm:$0xff] 0.0
          %596 = vst [vmem:[#allocation3 + $0x20] sm:$0xff] 0.0
          %597 = vst [vmem:[#allocation3 + $0x28] sm:$0xff] 0.0
          %598 = vst [vmem:[#allocation3 + $0x30] sm:$0xff] 0.0
          %599 = vst [vmem:[#allocation3 + $0x38] sm:$0xff] 0.0
        $region89: #{tpu_custom_call.1} parent=80 // pred_fallthru
          _
        %v600 = vld [vmem:[#allocation2] sm:$0xf]
        %v601 = vld [vmem:[#allocation2 + $0x4] sm:$0xf]
        %v602 = vld [vmem:[#allocation2 + $0x8] sm:$0xf]
        %v603 = vld [vmem:[#allocation2 + $0xc] sm:$0xf]
        %v604 = vld [vmem:[%s322] sm:$0xf]
        %v605 = vld [vmem:[%s322 + $0x4] sm:$0xf]
        %v606 = vld [vmem:[%s322 + $0x8] sm:$0xf]
        %v607 = vld [vmem:[%s322 + $0xc] sm:$0xf]
        %v608 = vld [vmem:[%s373] sm:$0x1]
        %v610 = vlaneseq
        %v611 = vshrl.u32 %v610, 7
        %v612 = vsub.s32 0, %v611
        %v613 = vrot.slane %v608, %v612
        %v619 = vunpack.c.l.b16 %v600
        %v620 = vunpack.c.l.b16 %v601
        %v621 = vunpack.c.l.b16 %v602
        %v622 = vunpack.c.l.b16 %v603
        %v623 = vpack.c.b16 %v620, %v619
        %v624 = vpack.c.b16 %v622, %v621
        %v629 = vunpack.c.l.b16 %v604
        %v630 = vunpack.c.l.b16 %v605
        %v631 = vunpack.c.l.b16 %v606
        %v632 = vunpack.c.l.b16 %v607
        %v633 = vpack.c.b16 %v630, %v629
        %v634 = vpack.c.b16 %v632, %v631
        %vm637 = vcmask 261120
        %v639 = vsel %vm637, %v623, 0
        %v642 = vsel %vm637, %v624, 0
        %644 = vmatprep.subr.bf16.mxu0 0
        %645 = vmatpush1.bf16.msra.mxu0 0
        %646 = vmatprep.subr.bf16.mxu0 0
        %647 = vmatpush1.bf16.msra.mxu0 0
        %648 = vmatprep.subr.bf16.mxu0 0
        %649 = vmatpush1.bf16.msra.mxu0 0
        %650 = vmatprep.subr.bf16.mxu0 0
        %651 = vmatpush1.bf16.msra.mxu0 0
        %652 = vmatprep.subr.bf16.mxu0 0
        %653 = vmatpush1.bf16.msra.mxu0 0
        %654 = vmatprep.subr.bf16.mxu0 0
        %655 = vmatpush1.bf16.msra.mxu0 0
        %656 = vmatprep.subr.bf16.mxu0 0
        %657 = vmatpush1.bf16.msra.mxu0 %v634
        %658 = vmatprep.subr.bf16.mxu0 0
        %659 = vmatpush1.bf16.msra.mxu0 %v633
        %660 = vmatprep.subr.bf16.mxu0 0
        %661 = vmatpush2.bf16.msra.mxu0 0
        %662 = vmatprep.subr.bf16.mxu0 0
        %663 = vmatpush2.bf16.msra.mxu0 0
        %664 = vmatprep.subr.bf16.mxu0 0
        %665 = vmatpush2.bf16.msra.mxu0 0
        %666 = vmatprep.subr.bf16.mxu0 0
        %667 = vmatpush2.bf16.msra.mxu0 0
        %668 = vmatprep.subr.bf16.mxu0 0
        %669 = vmatpush2.bf16.msra.mxu0 0
        %670 = vmatprep.subr.bf16.mxu0 0
        %671 = vmatpush2.bf16.msra.mxu0 0
        %672 = vmatprep.subr.bf16.mxu0 0
        %673 = vmatpush2.bf16.msra.mxu0 0
        %674 = vmatprep.subr.bf16.mxu0 0
        %675 = vmatpush2.bf16.msra.mxu0 0
        %676 = vmatprep.mubr.bf16.mxu0 0
        %677 = vmatmul.mubr.bf16.gmra.mxu0 %v639
        %v678 = vpop.f32.mrf.mxu0
        %v679 = vadd.f32 %v613, %v678
        %v680 = vpop.f32.mrf.mxu0
        %v681 = vpop.f32.mrf.mxu0
        %v682 = vadd.f32 %v613, %v681
        %v683 = vpop.f32.mrf.mxu0
        %684 = vmatprep.mubr.bf16.mxu0 0
        %685 = vmatmul.mubr.bf16.gmra.mxu0 %v642
        %v686 = vpop.f32.mrf.mxu0
        %v687 = vadd.f32 %v613, %v686
        %v688 = vpop.f32.mrf.mxu0
        %v689 = vpop.f32.mrf.mxu0
        %v690 = vadd.f32 %v613, %v689
        %v691 = vpop.f32.mrf.mxu0
        %692 = vdwg.mxu0
        %v693 = vmul.f32 %v679, 0.5
        %v694 = vmul.f32 %v682, 0.5
        %v695 = vmul.f32 %v687, 0.5
        %v696 = vmul.f32 %v690, 0.5
        %v697 = vmul.f32 %v679, 0.70710677
        %v698 = vmul.f32 %v682, 0.70710677
        %v699 = vmul.f32 %v687, 0.70710677
        %v700 = vmul.f32 %v690, 0.70710677
        %v701 = verf.f32.pop %v697
        %v702 = verf.f32.pop %v698
        %v703 = verf.f32.pop %v699
        %v704 = verf.f32.pop %v700
        %v705 = vadd.f32 %v701, 1.0
        %v706 = vadd.f32 %v702, 1.0
        %v707 = vadd.f32 %v703, 1.0
        %v708 = vadd.f32 %v704, 1.0
        %v709 = vmul.f32 %v693, %v705
        %v710 = vmul.f32 %v694, %v706
        %v711 = vmul.f32 %v695, %v707
        %v712 = vmul.f32 %v696, %v708
        %v713 = vld [vmem:[#allocation3] sm:$0xff]
        %v714 = vld [vmem:[#allocation3 + $0x8] sm:$0xff]
        %v715 = vld [vmem:[#allocation3 + $0x10] sm:$0xff]
        %v716 = vld [vmem:[#allocation3 + $0x18] sm:$0xff]
        %v717 = vld [vmem:[#allocation3 + $0x20] sm:$0xff]
        %v718 = vld [vmem:[#allocation3 + $0x28] sm:$0xff]
        %v719 = vld [vmem:[#allocation3 + $0x30] sm:$0xff]
        %v720 = vld [vmem:[#allocation3 + $0x38] sm:$0xff]
        %v721 = vpack.c.bf16 %v710, %v709
        %v722 = vpack.c.bf16 %v712, %v711
        %v723 = vld [vmem:[%s379] sm:$0xff]
        %v724 = vld [vmem:[%s379 + $0x8] sm:$0xff]
        %v725 = vld [vmem:[%s379 + $0x10] sm:$0xff]
        %v726 = vld [vmem:[%s379 + $0x18] sm:$0xff]
        %v727 = vld [vmem:[%s379 + $0x20] sm:$0xff]
        %v728 = vld [vmem:[%s379 + $0x28] sm:$0xff]
        %v729 = vld [vmem:[%s379 + $0x30] sm:$0xff]
        %v730 = vld [vmem:[%s379 + $0x38] sm:$0xff]
        %v731 = vld [vmem:[%s379 + $0x40] sm:$0xff]
        %v732 = vld [vmem:[%s379 + $0x48] sm:$0xff]
        %v733 = vld [vmem:[%s379 + $0x50] sm:$0xff]
        %v734 = vld [vmem:[%s379 + $0x58] sm:$0xff]
        %v735 = vld [vmem:[%s379 + $0x60] sm:$0xff]
        %v736 = vld [vmem:[%s379 + $0x68] sm:$0xff]
        %v737 = vld [vmem:[%s379 + $0x70] sm:$0xff]
        %v738 = vld [vmem:[%s379 + $0x78] sm:$0xff]
        %v755 = vunpack.c.l.b16 %v723
        %v756 = vunpack.c.h.b16 %v723
        %v757 = vunpack.c.l.b16 %v724
        %v758 = vunpack.c.h.b16 %v724
        %v759 = vunpack.c.l.b16 %v725
        %v760 = vunpack.c.h.b16 %v725
        %v761 = vunpack.c.l.b16 %v726
        %v762 = vunpack.c.h.b16 %v726
        %v763 = vunpack.c.l.b16 %v727
        %v764 = vunpack.c.h.b16 %v727
        %v765 = vunpack.c.l.b16 %v728
        %v766 = vunpack.c.h.b16 %v728
        %v767 = vunpack.c.l.b16 %v729
        %v768 = vunpack.c.h.b16 %v729
        %v769 = vunpack.c.l.b16 %v730
        %v770 = vunpack.c.h.b16 %v730
        %v771 = vunpack.c.l.b16 %v731
        %v772 = vunpack.c.h.b16 %v731
        %v773 = vunpack.c.l.b16 %v732
        %v774 = vunpack.c.h.b16 %v732
        %v775 = vunpack.c.l.b16 %v733
        %v776 = vunpack.c.h.b16 %v733
        %v777 = vunpack.c.l.b16 %v734
        %v778 = vunpack.c.h.b16 %v734
        %v779 = vunpack.c.l.b16 %v735
        %v780 = vunpack.c.h.b16 %v735
        %v781 = vunpack.c.l.b16 %v736
        %v782 = vunpack.c.h.b16 %v736
        %v783 = vunpack.c.l.b16 %v737
        %v784 = vunpack.c.h.b16 %v737
        %v785 = vunpack.c.l.b16 %v738
        %v786 = vunpack.c.h.b16 %v738
        %v787 = vpack.c.b16 %v757, %v755
        %v788 = vpack.c.b16 %v758, %v756
        %v789 = vpack.c.b16 %v761, %v759
        %v790 = vpack.c.b16 %v762, %v760
        %v791 = vpack.c.b16 %v765, %v763
        %v792 = vpack.c.b16 %v766, %v764
        %v793 = vpack.c.b16 %v769, %v767
        %v794 = vpack.c.b16 %v770, %v768
        %v795 = vpack.c.b16 %v773, %v771
        %v796 = vpack.c.b16 %v774, %v772
        %v797 = vpack.c.b16 %v777, %v775
        %v798 = vpack.c.b16 %v778, %v776
        %v799 = vpack.c.b16 %v781, %v779
        %v800 = vpack.c.b16 %v782, %v780
        %v801 = vpack.c.b16 %v785, %v783
        %v802 = vpack.c.b16 %v786, %v784
        %819 = vmatprep.subr.bf16.mxu0 %v802
        %820 = vmatpush1.bf16.msra.mxu0 %v801
        %821 = vmatprep.subr.bf16.mxu0 %v800
        %822 = vmatpush1.bf16.msra.mxu0 %v799
        %823 = vmatprep.subr.bf16.mxu0 %v798
        %824 = vmatpush1.bf16.msra.mxu0 %v797
        %825 = vmatprep.subr.bf16.mxu0 %v796
        %826 = vmatpush1.bf16.msra.mxu0 %v795
        %827 = vmatprep.subr.bf16.mxu0 %v794
        %828 = vmatpush1.bf16.msra.mxu0 %v793
        %829 = vmatprep.subr.bf16.mxu0 %v792
        %830 = vmatpush1.bf16.msra.mxu0 %v791
        %831 = vmatprep.subr.bf16.mxu0 %v790
        %832 = vmatpush1.bf16.msra.mxu0 %v789
        %833 = vmatprep.subr.bf16.mxu0 %v788
        %834 = vmatpush1.bf16.msra.mxu0 %v787
        %835 = vmatprep.subr.bf16.mxu0 0
        %836 = vmatpush2.bf16.msra.mxu0 0
        %837 = vmatprep.subr.bf16.mxu0 0
        %838 = vmatpush2.bf16.msra.mxu0 0
        %839 = vmatprep.subr.bf16.mxu0 0
        %840 = vmatpush2.bf16.msra.mxu0 0
        %841 = vmatprep.subr.bf16.mxu0 0
        %842 = vmatpush2.bf16.msra.mxu0 0
        %843 = vmatprep.subr.bf16.mxu0 0
        %844 = vmatpush2.bf16.msra.mxu0 0
        %845 = vmatprep.subr.bf16.mxu0 0
        %846 = vmatpush2.bf16.msra.mxu0 0
        %847 = vmatprep.subr.bf16.mxu0 0
        %848 = vmatpush2.bf16.msra.mxu0 0
        %849 = vmatprep.subr.bf16.mxu0 0
        %850 = vmatpush2.bf16.msra.mxu0 0
        %851 = vmatprep.mubr.bf16.mxu0 0
        %852 = vmatmul.mubr.bf16.gmra.mxu0 %v721
        %v853 = vpop.f32.mrf.mxu0
        %v854 = vadd.f32 0.0, %v853
        %v855 = vpop.f32.mrf.mxu0
        %v856 = vadd.f32 0.0, %v855
        %v857 = vpop.f32.mrf.mxu0
        %v858 = vadd.f32 0.0, %v857
        %v859 = vpop.f32.mrf.mxu0
        %v860 = vadd.f32 0.0, %v859
        %861 = vmatprep.mubr.bf16.mxu0 0
        %862 = vmatmul.mubr.bf16.gmra.mxu0 %v722
        %v863 = vpop.f32.mrf.mxu0
        %v864 = vadd.f32 0.0, %v863
        %v865 = vpop.f32.mrf.mxu0
        %v866 = vadd.f32 0.0, %v865
        %v867 = vpop.f32.mrf.mxu0
        %v868 = vadd.f32 0.0, %v867
        %v869 = vpop.f32.mrf.mxu0
        %v870 = vadd.f32 0.0, %v869
        %871 = vdwg.mxu0
        %v872 = vadd.f32 %v713, %v854
        %v873 = vadd.f32 %v714, %v856
        %v874 = vadd.f32 %v715, %v858
        %v875 = vadd.f32 %v716, %v860
        %v876 = vadd.f32 %v717, %v864
        %v877 = vadd.f32 %v718, %v866
        %v878 = vadd.f32 %v719, %v868
        %v879 = vadd.f32 %v720, %v870
        %880 = vst [vmem:[#allocation3] sm:$0xff] %v872
        %881 = vst [vmem:[#allocation3 + $0x8] sm:$0xff] %v873
        %882 = vst [vmem:[#allocation3 + $0x10] sm:$0xff] %v874
        %883 = vst [vmem:[#allocation3 + $0x18] sm:$0xff] %v875
        %884 = vst [vmem:[#allocation3 + $0x20] sm:$0xff] %v876
        %885 = vst [vmem:[#allocation3 + $0x28] sm:$0xff] %v877
        %886 = vst [vmem:[#allocation3 + $0x30] sm:$0xff] %v878
        %887 = vst [vmem:[#allocation3 + $0x38] sm:$0xff] %v879
        %p888 = scmp.eq.s32.totalorder %s25, 1
        // Predicated region
        $region90: #{tpu_custom_call.1} parent=80 // pred_check
          %p889 = pneg %p888
        $region91: #{tpu_custom_call.1} parent=80 // pred_check_branch
          %891 = sbr.rel (%p889) target = $region93
        $region92: #{tpu_custom_call.1} parent=80 // pred_region
          %v892 = vld [vmem:[#allocation3] sm:$0xff]
          %v893 = vld [vmem:[#allocation3 + $0x8] sm:$0xff]
          %v894 = vld [vmem:[#allocation3 + $0x10] sm:$0xff]
          %v895 = vld [vmem:[#allocation3 + $0x18] sm:$0xff]
          %v896 = vld [vmem:[#allocation3 + $0x20] sm:$0xff]
          %v897 = vld [vmem:[#allocation3 + $0x28] sm:$0xff]
          %v898 = vld [vmem:[#allocation3 + $0x30] sm:$0xff]
          %v899 = vld [vmem:[#allocation3 + $0x38] sm:$0xff]
          %v900 = vld [vmem:[%s5] sm:$0x3]
          %v902 = vlaneseq
          %v903 = vshrl.u32 %v902, 7
          %v904 = vsub.s32 0, %v903
          %v905 = vrot.slane %v900, %v904
          %v906 = vlaneseq
          %v907 = vshrl.u32 %v906, 7
          %v908 = vsub.s32 1, %v907
          %v909 = vrot.slane %v900, %v908
          %v912 = vadd.f32 %v892, %v905
          %v913 = vadd.f32 %v893, %v909
          %v914 = vadd.f32 %v894, %v905
          %v915 = vadd.f32 %v895, %v909
          %v916 = vadd.f32 %v896, %v905
          %v917 = vadd.f32 %v897, %v909
          %v918 = vadd.f32 %v898, %v905
          %v919 = vadd.f32 %v899, %v909
          %v920 = vpack.c.bf16 %v914, %v912
          %v921 = vpack.c.bf16 %v915, %v913
          %v922 = vpack.c.bf16 %v918, %v916
          %v923 = vpack.c.bf16 %v919, %v917
          %v928 = vunpack.c.l.b16 %v920
          %v929 = vunpack.c.l.b16 %v921
          %v930 = vunpack.c.h.b16 %v920
          %v931 = vunpack.c.h.b16 %v921
          %v932 = vunpack.c.l.b16 %v922
          %v933 = vunpack.c.l.b16 %v923
          %v934 = vunpack.c.h.b16 %v922
          %v935 = vunpack.c.h.b16 %v923
          %v936 = vpack.c.b16 %v929, %v928
          %v937 = vpack.c.b16 %v931, %v930
          %v938 = vpack.c.b16 %v933, %v932
          %v939 = vpack.c.b16 %v935, %v934
          %944 = vst [vmem:[%s363] sm:$0xff] %v936
          %945 = vst [vmem:[%s363 + $0x8] sm:$0xff] %v937
          %946 = vst [vmem:[%s363 + $0x10] sm:$0xff] %v938
          %947 = vst [vmem:[%s363 + $0x18] sm:$0xff] %v939
        $region93: #{tpu_custom_call.1} parent=80 // pred_fallthru
          _
        %s948 = sand.u32 %s186, 1
        %s949 = scalar_lea.sflag [#allocation6], %s948
        %s950 = sand.u32 %s186, 1
        %s951 = smul.addr %s950, 32
        %s952 = scalar_lea.vmem [#allocation5], %s951
        // Predicated region
        $region94: #{tpu_custom_call.1} parent=80 // pred_check
          %p953 = pneg %p196
        $region95: #{tpu_custom_call.1} parent=80 // pred_check_branch
          %955 = sbr.rel (%p953) target = $region97
        $region96: #{tpu_custom_call.1} parent=80 // pred_region
          %s956 = smul.u32 2, %s24
          %s958 = ssub.s32 512, 512
          %959 = vsyncadd %s949, %s958
          %s960 = smul.addr %s956, 4
          %s961 = smul.addr %s960, 64
          %s962 = scalar_lea.hbm %s6, %s961
          %s963 = sshll.u32 %s952, 4
          %s964 = int_to_ptr.vmem [resolvable:$true] %s963
          %969 = dma.vmem_to_hbm [thread:$0]  %s964, 512, %s962, %s949, 128, 128, 8
        $region97: #{tpu_custom_call.1} parent=80 // pred_fallthru
          _
      $region81: #{tpu_custom_call.1} parent=5 // pred_fallthru
        _
      %p970 = scmp.le.s32.totalorder 2, %s15
      // Predicated region
      $region98: #{tpu_custom_call.1} parent=5 // pred_check
        %p971 = pneg %p970
      $region99: #{tpu_custom_call.1} parent=5 // pred_check_branch
        %973 = sbr.rel (%p971) target = $region101
      $region100: #{tpu_custom_call.1} parent=5 // pred_region
        %s974 = ssub.s32 %s15, 2
        // Predicated region
        $region102: #{tpu_custom_call.1} parent=100 // pred_check
          %p975 = pneg %p202
        $region103: #{tpu_custom_call.1} parent=100 // pred_check_branch
          %977 = sbr.rel (%p975) target = $region105
        $region104: #{tpu_custom_call.1} parent=100 // pred_region
          %s978 = sand.u32 %s187, 1
          %s979 = scalar_lea.sflag [#allocation6], %s978
          %s980 = sand.u32 %s187, 1
          %s981 = smul.addr %s980, 32
          %s982 = scalar_lea.vmem [#allocation5], %s981
          %983 = dma.done %s979, 512
        $region105: #{tpu_custom_call.1} parent=100 // pred_fallthru
          _
      $region101: #{tpu_custom_call.1} parent=5 // pred_fallthru
        _
    $region6: #{tpu_custom_call.1} parent=1 // loop_footer
      %s19 = sadd.s32 1, %s15
    $region7: #{tpu_custom_call.1} parent=1 // loop_footer_branch
      %14 = sbr.rel target = $region3
    $region8: #{tpu_custom_call.1} parent=1 // loop_exit
      _
    %984 = vsyncpa [#allocation6], 1
    %s985 = scalar_lea.sflag [#allocation6], 1
    %986 = vsyncpa %s985, 1

</llo_original>
